<compile_context>
chip_gen: v5e
topology: v5e:2x2
jax: 0.10.0
libtpu: 0.0.40
codegen_flags: <defaults>
</compile_context>

<pallas_src>
import jax
import jax.numpy as jnp
from jax.experimental import pallas as pl
from jax.experimental.pallas import tpu as pltpu

_LANE = 128  # TPU vreg lane width


def _round_up(v, m):
    return ((v + m - 1) // m) * m


def itm_head_kernel(x_ref, w1_ref, b1_ref, w2_ref, b2_ref, o_ref):
    """Fused MLP head on one batch tile: tanh(x @ W1 + b1) @ W2pad + b2pad.

    x_ref : [TB, H]     bf16 (VMEM, tiled over batch)
    w1_ref: [H, H]      bf16 (VMEM, resident, single-buffered)
    b1_ref: [1, H]      f32  (VMEM, resident)
    w2_ref: [H, N_PAD]  bf16 (VMEM, resident, zero-padded to 128 lanes)
    b2_ref: [1, N_PAD]  f32  (VMEM, resident, zero-padded)
    o_ref : [TB, N_PAD] bf16 (VMEM, tiled over batch, lane-dense stores)
    """
    # First linear: bf16 inputs on the MXU, f32 accumulate.
    h = jnp.dot(x_ref[...], w1_ref[...], preferred_element_type=jnp.float32)
    # Bias + tanh in f32 (VPU/EUP; f32 keeps v5e correct).
    h = jnp.tanh(h + b1_ref[...])
    # Second linear into the lane-padded logits slab (bf16 x bf16 -> f32 acc).
    logits = jnp.dot(h.astype(w2_ref.dtype), w2_ref[...],
                     preferred_element_type=jnp.float32)
    o_ref[...] = (logits + b2_ref[...]).astype(o_ref.dtype)


def prepare_itm_params(w1, b1, w2, b2, *, compute_dtype=jnp.bfloat16):
    """One-time parameter prep (done at model init, NOT per forward call).

    w1: [H, H], b1: [H], w2: [H, 2], b2: [2]  (weights already [in, out]).
    Casts matmul weights to the compute dtype and lane-pads the 2-class head
    to a full 128-lane slab so the kernel's output stores are dense.
    """
    H, n_cls = w2.shape
    n_pad = max(_LANE, pl.cdiv(n_cls, _LANE) * _LANE)

    w1_c = w1.astype(compute_dtype)
    w2_p = (jnp.zeros((H, n_pad), dtype=jnp.float32)
            .at[:, :n_cls].set(w2.astype(jnp.float32))
            .astype(compute_dtype))
    b1_2d = b1.reshape(1, H).astype(jnp.float32)
    b2_p = (jnp.zeros((1, n_pad), dtype=jnp.float32)
            .at[:, :n_cls].set(b2.astype(jnp.float32).reshape(1, -1)))
    return {"w1": w1_c, "b1": b1_2d, "w2": w2_p, "b2": b2_p,
            "n_cls": n_cls, "n_pad": n_pad, "hidden": H,
            "compute_dtype": compute_dtype}


def itm_head_forward(cls_feature, params, *, tb=None):
    """ITMHead forward.  cls_feature: [B, H].  Returns f32 logits [B, 2]."""
    B, H = cls_feature.shape
    assert H == params["hidden"]
    n_cls, n_pad = params["n_cls"], params["n_pad"]
    w1, b1, w2, b2 = params["w1"], params["b1"], params["w2"], params["b2"]
    cdt = params["compute_dtype"]
    cdt_size = jnp.dtype(cdt).itemsize

    # bf16 matmul input (single biggest lever: bf16-native MXU + half the x HBM read).
    x = cls_feature.astype(cdt)

    # Batch tile: at least 2 grid steps when the batch allows it (v7x megacore sharding
    # + x-DMA/compute overlap), sublane-aligned, capped so double-buffered x/out tiles
    # plus single-buffered resident weights stay well inside every generation's
    # scoped-VMEM default (v5e 16 MiB) without needing vmem_limit_bytes.
    if tb is None:
        tb = min(256, max(8, _round_up(pl.cdiv(B, 2), 8)))
    tb = max(8, min(tb, _round_up(B, 8)))
    grid_b = pl.cdiv(B, tb)  # no jnp.pad of x: edge block is masked by Pallas

    cost = pl.CostEstimate(
        flops=2 * B * H * H + 2 * B * H * n_pad,
        transcendentals=B * H,
        bytes_accessed=(B * H + H * H + H * n_pad) * cdt_size
                       + (H + n_pad) * 4
                       + B * n_pad * cdt_size,
    )

    out_padded = pl.pallas_call(
        itm_head_kernel,
        out_shape=jax.ShapeDtypeStruct((B, n_pad), jnp.bfloat16),
        grid_spec=pltpu.PrefetchScalarGridSpec(
            num_scalar_prefetch=0,
            grid=(grid_b,),
            in_specs=[
                # x: tiled over batch (default double-buffering hides the DMA).
                pl.BlockSpec((tb, H), lambda i: (i, 0)),
                # Resident params: constant index_map + single buffer (no re-DMA,
                # no wasted second VMEM copy of the H x H weight).
                pl.BlockSpec((H, H), lambda i: (0, 0),
                             pipeline_mode=pl.Buffered(1)),
                pl.BlockSpec((1, H), lambda i: (0, 0),
                             pipeline_mode=pl.Buffered(1)),
                pl.BlockSpec((H, n_pad), lambda i: (0, 0),
                             pipeline_mode=pl.Buffered(1)),
                pl.BlockSpec((1, n_pad), lambda i: (0, 0),
                             pipeline_mode=pl.Buffered(1)),
            ],
            out_specs=pl.BlockSpec((tb, n_pad), lambda i: (i, 0)),
        ),
        compiler_params=pltpu.CompilerParams(
            dimension_semantics=("parallel",)),
        cost_estimate=cost,
    )(x, w1, b1, w2, b2)

    # Slice off the lane padding and upcast the 2-class logits to f32.
    return out_padded[:B, :n_cls].astype(jnp.float32)


def xavier_uniform(key, fan_in, fan_out, dtype=jnp.float32):
    """Matches torch.nn.init.xavier_uniform_ bound: sqrt(6 / (fan_in + fan_out))."""
    limit = (6.0 / (fan_in + fan_out)) ** 0.5
    return jax.random.uniform(key, (fan_in, fan_out), dtype=dtype,
                              minval=-limit, maxval=limit)


def reference_forward(x, w1, b1, w2, b2):
    """Plain-JAX f32 reference of the same math (dropout = identity at inference)."""
    h = jnp.tanh(x @ w1 + b1)
    return h @ w2 + b2


if __name__ == "__main__":
    # Small shapes consistent with the module: batch=8, hidden=32, 2 ITM classes.
    B, H, NCLS = 8, 32, 2

    key = jax.random.PRNGKey(0)
    k_x, k_w1, k_w2 = jax.random.split(key, 3)

    cls_feature = jax.random.normal(k_x, (B, H), dtype=jnp.float32)

    # Parameters (xavier-uniform weights, zero biases), stored as [in, out]
    # (i.e. the transpose of PyTorch's Linear weight layout).
    w1 = xavier_uniform(k_w1, H, H)
    b1 = jnp.zeros((H,), dtype=jnp.float32)
    w2 = xavier_uniform(k_w2, H, NCLS)
    b2 = jnp.zeros((NCLS,), dtype=jnp.float32)

    # One-time parameter prep (padding / bf16 cast hoisted out of the forward path).
    params = prepare_itm_params(w1, b1, w2, b2)

    # TODO(synk): Dropout(p=0.1) is a no-op at inference; training-mode dropout
    # (pltpu.prng_random_bits masking) is intentionally not emulated here.

    out = itm_head_forward(cls_feature, params)
    out = jax.block_until_ready(out)

    ref = reference_forward(cls_feature, w1, b1, w2, b2)
    assert out.shape == (B, NCLS)
    # bf16 matmul inputs + bf16 output slab -> relaxed tolerance vs f32 reference.
    assert jnp.allclose(out, ref, atol=5e-2, rtol=5e-2), "mismatch vs JAX reference"

    print("KERNEL_OK")
</pallas_src>

<mosaic_0001>
module attributes {stable_mosaic.version = 11 : i64} {
  func.func @itm_head_kernel(%arg0: i32, %arg1: memref<8x32xbf16, #tpu.memory_space<vmem>>, %arg2: memref<32x32xbf16, #tpu.memory_space<vmem>>, %arg3: memref<1x32xf32, #tpu.memory_space<vmem>>, %arg4: memref<32x128xbf16, #tpu.memory_space<vmem>>, %arg5: memref<1x128xf32, #tpu.memory_space<vmem>>, %arg6: memref<8x128xbf16, #tpu.memory_space<vmem>>) attributes {dimension_semantics = [#tpu.dimension_semantics<parallel>], iteration_bounds = array<i64: 1>, scalar_prefetch = 0 : i64, scratch_operands = 0 : i64, tpu.core_type = #tpu.core_type<tc>, window_params = [{transform_indices = @transform_0, window_bounds = array<i64: 8, 32>}, {pipeline_mode = #tpu.pipeline_mode<synchronous>, transform_indices = @transform_1, window_bounds = array<i64: 32, 32>}, {pipeline_mode = #tpu.pipeline_mode<synchronous>, transform_indices = @transform_2, window_bounds = array<i64: 1, 32>}, {pipeline_mode = #tpu.pipeline_mode<synchronous>, transform_indices = @transform_3, window_bounds = array<i64: 32, 128>}, {pipeline_mode = #tpu.pipeline_mode<synchronous>, transform_indices = @transform_4, window_bounds = array<i64: 1, 128>}, {transform_indices = @transform_5, window_bounds = array<i64: 8, 128>}]} {
    %c0 = arith.constant 0 : index
    %c0_0 = arith.constant 0 : index
    %0 = vector.load %arg1[%c0, %c0_0] : memref<8x32xbf16, #tpu.memory_space<vmem>>, vector<8x32xbf16>
    %c0_1 = arith.constant 0 : index
    %c0_2 = arith.constant 0 : index
    %1 = vector.load %arg2[%c0_1, %c0_2] : memref<32x32xbf16, #tpu.memory_space<vmem>>, vector<32x32xbf16>
    %cst = arith.constant dense<0.000000e+00> : vector<8x32xf32>
    %2 = tpu.matmul %0, %1, %cst {dimension_numbers = #tpu.dot_dimension_numbers<[1], [0], [0], [1], [0, 0, 1, 1], [], []>} : vector<8x32xbf16>, vector<32x32xbf16>, vector<8x32xf32> -> vector<8x32xf32>
    %c0_3 = arith.constant 0 : index
    %c0_4 = arith.constant 0 : index
    %3 = vector.load %arg3[%c0_3, %c0_4] : memref<1x32xf32, #tpu.memory_space<vmem>>, vector<1x32xf32>
    %4 = vector.broadcast %3 : vector<1x32xf32> to vector<8x32xf32>
    %5 = arith.addf %2, %4 : vector<8x32xf32>
    %6 = math.tanh %5 : vector<8x32xf32>
    %7 = arith.truncf %6 : vector<8x32xf32> to vector<8x32xbf16>
    %c0_5 = arith.constant 0 : index
    %c0_6 = arith.constant 0 : index
    %8 = vector.load %arg4[%c0_5, %c0_6] : memref<32x128xbf16, #tpu.memory_space<vmem>>, vector<32x128xbf16>
    %cst_7 = arith.constant dense<0.000000e+00> : vector<8x128xf32>
    %9 = tpu.matmul %7, %8, %cst_7 {dimension_numbers = #tpu.dot_dimension_numbers<[1], [0], [0], [1], [0, 0, 1, 1], [], []>} : vector<8x32xbf16>, vector<32x128xbf16>, vector<8x128xf32> -> vector<8x128xf32>
    %c0_8 = arith.constant 0 : index
    %c0_9 = arith.constant 0 : index
    %10 = vector.load %arg5[%c0_8, %c0_9] : memref<1x128xf32, #tpu.memory_space<vmem>>, vector<1x128xf32>
    %11 = vector.broadcast %10 : vector<1x128xf32> to vector<8x128xf32>
    %12 = arith.addf %9, %11 : vector<8x128xf32>
    %13 = arith.truncf %12 : vector<8x128xf32> to vector<8x128xbf16>
    %c0_10 = arith.constant 0 : index
    %c0_11 = arith.constant 0 : index
    %14 = vector.load %arg6[%c0_10, %c0_11] : memref<8x128xbf16, #tpu.memory_space<vmem>>, vector<8x128xbf16>
    tpu.vector_store %arg6[%c0_10, %c0_11], %13 {strides = array<i32>} : memref<8x128xbf16, #tpu.memory_space<vmem>>, vector<8x128xbf16>,
    return
  }
  func.func @transform_0(%arg0: i32) -> (i32, i32) {
    %c0_i32 = arith.constant 0 : i32
    %c0_i32_0 = arith.constant 0 : i32
    return %arg0, %c0_i32 : i32, i32
  }
  func.func @transform_1(%arg0: i32) -> (i32, i32) {
    %c0_i32 = arith.constant 0 : i32
    %c0_i32_0 = arith.constant 0 : i32
    %c0_i32_1 = arith.constant 0 : i32
    return %c0_i32, %c0_i32_0 : i32, i32
  }
  func.func @transform_2(%arg0: i32) -> (i32, i32) {
    %c0_i32 = arith.constant 0 : i32
    %c0_i32_0 = arith.constant 0 : i32
    %c0_i32_1 = arith.constant 0 : i32
    return %c0_i32, %c0_i32_0 : i32, i32
  }
  func.func @transform_3(%arg0: i32) -> (i32, i32) {
    %c0_i32 = arith.constant 0 : i32
    %c0_i32_0 = arith.constant 0 : i32
    %c0_i32_1 = arith.constant 0 : i32
    return %c0_i32, %c0_i32_0 : i32, i32
  }
  func.func @transform_4(%arg0: i32) -> (i32, i32) {
    %c0_i32 = arith.constant 0 : i32
    %c0_i32_0 = arith.constant 0 : i32
    %c0_i32_1 = arith.constant 0 : i32
    return %c0_i32, %c0_i32_0 : i32, i32
  }
  func.func @transform_5(%arg0: i32) -> (i32, i32) {
    %c0_i32 = arith.constant 0 : i32
    %c0_i32_0 = arith.constant 0 : i32
    return %arg0, %c0_i32 : i32, i32
  }
}

</mosaic_0001>

<llo_original>
// kernel: tpu_custom_call.1
$region0: #{tpu_custom_call.1}
  #allocation0 [shape = 'u32[]', space=smem, size = 0x4, offset = 0x4, fixed_abs, tag = 'smem constant byte address 0x4 - core index']
  #allocation1 [shape = 'u32[72,128]{1,0:T(1,128)}', space=vmem, size = 0x9000, scoped, tag = 'internal scratch']
  %s0 = inlined_call_operand.hbm [shape: bf16[8,32], index: 0, kind: input, shape index: {}]
  %s1 = inlined_call_operand.hbm [shape: bf16[32,32], index: 1, kind: input, shape index: {}]
  %s2 = inlined_call_operand.vmem [shape: f32[1,32], index: 2, kind: input, shape index: {}]
  %s3 = inlined_call_operand.hbm [shape: bf16[32,128], index: 3, kind: input, shape index: {}]
  %s4 = inlined_call_operand.vmem [shape: f32[1,128], index: 4, kind: input, shape index: {}]
  %s5 = inlined_call_operand.hbm [shape: bf16[8,128], index: 5, kind: output, shape index: {}]
  %s6 = sld [smem:[#allocation0]]
  $region42: #{tpu_custom_call.1} parent=0
    _
  %s8 = ssub.s32 1, %s6
  %s9 = scalar_select 0, %s8, %s6
  $region1: #{tpu_custom_call.1} parent=0
    #allocation2 [shape = 'u8[2048]{0}', space=vmem, size = 0x800, scoped, tag = 'input window, operand 0, single buffered']
    #allocation3 [shape = 's32[1]{0}', space=sflag, size = 0x4, scoped, tag = 'scoped memory for tpu_custom_call.1']
    #allocation4 [shape = 's32[1]{0}', space=sflag, size = 0x4, scoped, tag = 'scoped memory for tpu_custom_call.1']
    #allocation5 [shape = 'u8[8192]{0}', space=vmem, size = 0x2000, scoped, tag = 'input window, operand 1, single buffered']
    #allocation6 [shape = 's32[1]{0}', space=sflag, size = 0x4, scoped, tag = 'scoped memory for tpu_custom_call.1']
    #allocation7 [shape = 'u8[8192]{0}', space=vmem, size = 0x2000, scoped, tag = 'input window, operand 3, single buffered']
    #allocation8 [shape = 'u8[2048]{0}', space=vmem, size = 0x800, scoped, tag = 'output window, operand 0, single buffered']
    %10 = vsyncpa [#allocation3], 0
    %11 = vsyncpa [#allocation6], 0
    %12 = vsyncpa [#allocation4], 0
    // Predicated region
    $region2: #{tpu_custom_call.1} parent=1 // pred_check
      _
    $region3: #{tpu_custom_call.1} parent=1 // pred_check_branch
      %14 = sbr.rel (0) target = $region5
    $region4: #{tpu_custom_call.1} parent=1 // pred_region
      %16 = vsyncadd [#allocation3], 0
      %s18 = sshll.u32 %s0, 4
      %s19 = int_to_ptr.hbm [resolvable:$true] %s18
      %s20 = sshll.u32 [#allocation2], 4
      %s21 = int_to_ptr.vmem [resolvable:$true] %s20
      %23 = dma.hbm_to_vmem [thread:$0]  %s19, 64, %s21, [#allocation3]
    $region5: #{tpu_custom_call.1} parent=1 // pred_fallthru
      _
    // Predicated region
    $region6: #{tpu_custom_call.1} parent=1 // pred_check
      _
    $region7: #{tpu_custom_call.1} parent=1 // pred_check_branch
      %25 = sbr.rel (0) target = $region9
    $region8: #{tpu_custom_call.1} parent=1 // pred_region
      %27 = vsyncadd [#allocation6], 0
      %s28 = sshll.u32 %s1, 4
      %s29 = int_to_ptr.hbm [resolvable:$true] %s28
      %s30 = sshll.u32 [#allocation5], 4
      %s31 = int_to_ptr.vmem [resolvable:$true] %s30
      %36 = dma.hbm_to_vmem [thread:$0]  %s29, 256, %s31, [#allocation6], 64, 64, 4
    $region9: #{tpu_custom_call.1} parent=1 // pred_fallthru
      _
    // Predicated region
    $region10: #{tpu_custom_call.1} parent=1 // pred_check
      _
    $region11: #{tpu_custom_call.1} parent=1 // pred_check_branch
      %38 = sbr.rel (0) target = $region13
    $region12: #{tpu_custom_call.1} parent=1 // pred_region
      _
    $region13: #{tpu_custom_call.1} parent=1 // pred_fallthru
      _
    // Predicated region
    $region14: #{tpu_custom_call.1} parent=1 // pred_check
      _
    $region15: #{tpu_custom_call.1} parent=1 // pred_check_branch
      %40 = sbr.rel (0) target = $region17
    $region16: #{tpu_custom_call.1} parent=1 // pred_region
      %42 = vsyncadd [#allocation6], 0
      %s43 = sshll.u32 %s3, 4
      %s44 = int_to_ptr.hbm [resolvable:$true] %s43
      %s45 = sshll.u32 [#allocation7], 4
      %s46 = int_to_ptr.vmem [resolvable:$true] %s45
      %51 = dma.hbm_to_vmem [thread:$0]  %s44, 256, %s46, [#allocation6], 64, 64, 4
    $region17: #{tpu_custom_call.1} parent=1 // pred_fallthru
      _
    // Predicated region
    $region18: #{tpu_custom_call.1} parent=1 // pred_check
      _
    $region19: #{tpu_custom_call.1} parent=1 // pred_check_branch
      %53 = sbr.rel (0) target = $region21
    $region20: #{tpu_custom_call.1} parent=1 // pred_region
      _
    $region21: #{tpu_custom_call.1} parent=1 // pred_fallthru
      _
    // Predicated region
    $region22: #{tpu_custom_call.1} parent=1 // pred_check
      _
    $region23: #{tpu_custom_call.1} parent=1 // pred_check_branch
      %55 = sbr.rel (0) target = $region25
    $region24: #{tpu_custom_call.1} parent=1 // pred_region
      %57 = dma.done [#allocation3], 64
    $region25: #{tpu_custom_call.1} parent=1 // pred_fallthru
      _
    // Predicated region
    $region26: #{tpu_custom_call.1} parent=1 // pred_check
      _
    $region27: #{tpu_custom_call.1} parent=1 // pred_check_branch
      %59 = sbr.rel (0) target = $region29
    $region28: #{tpu_custom_call.1} parent=1 // pred_region
      %61 = dma.done [#allocation6], 256
    $region29: #{tpu_custom_call.1} parent=1 // pred_fallthru
      _
    // Predicated region
    $region30: #{tpu_custom_call.1} parent=1 // pred_check
      _
    $region31: #{tpu_custom_call.1} parent=1 // pred_check_branch
      %63 = sbr.rel (0) target = $region33
    $region32: #{tpu_custom_call.1} parent=1 // pred_region
      %65 = dma.done [#allocation6], 256
    $region33: #{tpu_custom_call.1} parent=1 // pred_fallthru
      _
    %v67 = vld [vmem:[#allocation2] sm:$0xf]
    %v68 = vld [vmem:[#allocation5] sm:$0xf]
    %v69 = vld [vmem:[#allocation5 + $0x4] sm:$0xf]
    %v70 = vld [vmem:[#allocation5 + $0x8] sm:$0xf]
    %v71 = vld [vmem:[#allocation5 + $0xc] sm:$0xf]
    %v72 = vld [vmem:[%s2] sm:$0x1]
    %v74 = vperm.slane %v72, 0
    %v80 = vunpack.c.l.b16 %v68
    %v81 = vunpack.c.l.b16 %v69
    %v82 = vunpack.c.l.b16 %v70
    %v83 = vunpack.c.l.b16 %v71
    %v84 = vpack.c.b16 %v81, %v80
    %v85 = vpack.c.b16 %v83, %v82
    %vm88 = vcmask 261120
    %v90 = vsel %vm88, %v67, 0
    %92 = vmatpush.bf16.msra.mxu0 0
    %93 = vmatpush.bf16.msra.mxu0 0
    %94 = vmatpush.bf16.msra.mxu0 0
    %95 = vmatpush.bf16.msra.mxu0 0
    %96 = vmatpush.bf16.msra.mxu0 0
    %97 = vmatpush.bf16.msra.mxu0 0
    %98 = vmatpush.bf16.msra.mxu0 %v85
    %99 = vmatpush.bf16.msra.mxu0 %v84
    %100 = vmatmul.bf16.gmra.mxu0 %v90
    %v101 = vpop.f32.mrf.mxu0
    %v102 = vadd.f32 %v74, %v101
    %v103 = vpop.f32.mrf.mxu0
    %104 = vdwg.mxu0
    %v105 = vtanh.pop %v102
    %v106 = vpack.c.bf16 %v105, %v105
    %v107 = vld [vmem:[#allocation7] sm:$0xf]
    %v108 = vld [vmem:[#allocation7 + $0x4] sm:$0xf]
    %v109 = vld [vmem:[#allocation7 + $0x8] sm:$0xf]
    %v110 = vld [vmem:[#allocation7 + $0xc] sm:$0xf]
    %v111 = vld [vmem:[%s4] sm:$0x1]
    %v113 = vperm.slane %v111, 0
    %v119 = vunpack.c.l.b16 %v107
    %v120 = vunpack.c.l.b16 %v108
    %v121 = vunpack.c.l.b16 %v109
    %v122 = vunpack.c.l.b16 %v110
    %v123 = vpack.c.b16 %v120, %v119
    %v124 = vpack.c.b16 %v122, %v121
    %v128 = vsel %vm88, %v106, 0
    %130 = vmatpush.bf16.msra.mxu0 0
    %131 = vmatpush.bf16.msra.mxu0 0
    %132 = vmatpush.bf16.msra.mxu0 0
    %133 = vmatpush.bf16.msra.mxu0 0
    %134 = vmatpush.bf16.msra.mxu0 0
    %135 = vmatpush.bf16.msra.mxu0 0
    %136 = vmatpush.bf16.msra.mxu0 %v124
    %137 = vmatpush.bf16.msra.mxu0 %v123
    %138 = vmatmul.bf16.gmra.mxu0 %v128
    %v139 = vpop.f32.mrf.mxu0
    %v140 = vadd.f32 %v113, %v139
    %v141 = vpop.f32.mrf.mxu0
    %142 = vdwg.mxu0
    %v143 = vpack.c.bf16 %v140, %v140
    %144 = vst [vmem:[#allocation8] sm:$0xf] %v143
    // Predicated region
    $region34: #{tpu_custom_call.1} parent=1 // pred_check
      _
    $region35: #{tpu_custom_call.1} parent=1 // pred_check_branch
      %146 = sbr.rel (0) target = $region37
    $region36: #{tpu_custom_call.1} parent=1 // pred_region
      %148 = vsyncadd [#allocation4], 0
      %s150 = sshll.u32 [#allocation8], 4
      %s151 = int_to_ptr.vmem [resolvable:$true] %s150
      %s152 = sshll.u32 %s5, 4
      %s153 = int_to_ptr.hbm [resolvable:$true] %s152
      %155 = dma.vmem_to_hbm [thread:$0]  %s151, 64, %s153, [#allocation4]
    $region37: #{tpu_custom_call.1} parent=1 // pred_fallthru
      _
    // Predicated region
    $region38: #{tpu_custom_call.1} parent=1 // pred_check
      _
    $region39: #{tpu_custom_call.1} parent=1 // pred_check_branch
      %157 = sbr.rel (0) target = $region41
    $region40: #{tpu_custom_call.1} parent=1 // pred_region
      %159 = dma.done [#allocation4], 64
    $region41: #{tpu_custom_call.1} parent=1 // pred_fallthru
      _
    %160 = vsyncpa [#allocation3], 1
    %161 = vsyncpa [#allocation6], 1
    %162 = vsyncpa [#allocation4], 1

</llo_original>
